<compile_context>
chip_gen: v6e
topology: v6e:2x2x1
jax: 0.10.0
libtpu: 0.0.40
codegen_flags: <defaults>
</compile_context>

<pallas_src>
import numpy as np
import jax
import jax.numpy as jnp
from jax.experimental import pallas as pl
from jax.experimental.pallas import tpu as pltpu


def _kl_distill_kernel(t_ref, student_ref, teacher_ref, kl_ref):
    """t_ref: (1,) f32 in SMEM (temperature, scalar-prefetched).
    student_ref / teacher_ref: (TILE_B, C) logit blocks in VMEM.
    kl_ref: (TILE_B, 1) f32 per-row KL output block."""
    T = t_ref[0]
    inv_T = 1.0 / T

    s = student_ref[...].astype(jnp.float32) * inv_T
    t = teacher_ref[...].astype(jnp.float32) * inv_T

    # Teacher: numerically stable exp pieces.
    t_max = jnp.max(t, axis=-1, keepdims=True)
    t_shift = t - t_max
    t_exp = jnp.exp(t_shift)
    t_sum = jnp.sum(t_exp, axis=-1, keepdims=True)             # (TILE_B, 1)

    # Student: log-softmax pieces.
    s_max = jnp.max(s, axis=-1, keepdims=True)
    s_shift = s - s_max
    s_sum = jnp.sum(jnp.exp(s_shift), axis=-1, keepdims=True)  # (TILE_B, 1)
    s_lse = jnp.log(s_sum)

    # Per-row KL with the teacher-softmax division deferred to the row level:
    #   kl_row = sum_c p_c * [(t_shift_c - log t_sum) - (s_shift_c - s_lse)]
    #          = [sum_c t_exp_c * (t_shift_c - s_shift_c)] / t_sum
    #            + (s_lse - log t_sum)               (since sum_c p_c == 1)
    row_num = jnp.sum(t_exp * (t_shift - s_shift), axis=-1, keepdims=True)
    kl_ref[...] = row_num / t_sum + (s_lse - jnp.log(t_sum))   # (TILE_B, 1)


def _choose_tile_rows(B, C, itemsize):
    """~1 MiB per input block: already ~85% of HBM roofline for streaming
    kernels, keeps 2 inputs x 2 pipeline buffers + f32 temporaries well inside
    the scoped-VMEM defaults on v5e/v6e/v7x, and amortizes the ~0.35us
    per-grid-step overhead.  Keeps the sublane block dim 8-aligned."""
    target_bytes = 1 * 1024 * 1024
    rows = max(8, target_bytes // max(1, C * itemsize))
    rows = min(rows, B)
    if rows < B:
        rows = max(8, (rows // 8) * 8)
    return int(rows)


def feature_distribution_loss_pallas(student_outputs, teacher_outputs,
                                     temperature, tile_rows=None):
    """student_outputs, teacher_outputs: [B, C] logits (f32 or bf16).
    temperature: python/np scalar."""
    B, C = student_outputs.shape
    itemsize = jnp.dtype(student_outputs.dtype).itemsize
    if tile_rows is None:
        tile_rows = _choose_tile_rows(B, C, itemsize)
    num_tiles = pl.cdiv(B, tile_rows)

    t_arr = jnp.asarray(temperature, dtype=jnp.float32).reshape(1)

    cost = pl.CostEstimate(
        flops=10 * B * C,
        transcendentals=2 * B * C,
        bytes_accessed=2 * B * C * itemsize + 4 * B + 4,
    )

    kl_rows = pl.pallas_call(
        _kl_distill_kernel,
        out_shape=jax.ShapeDtypeStruct((B, 1), jnp.float32),
        grid_spec=pltpu.PrefetchScalarGridSpec(
            num_scalar_prefetch=1,
            grid=(num_tiles,),
            in_specs=[
                pl.BlockSpec((tile_rows, C), lambda i, t: (i, 0)),  # student
                pl.BlockSpec((tile_rows, C), lambda i, t: (i, 0)),  # teacher
            ],
            out_specs=pl.BlockSpec((tile_rows, 1), lambda i, t: (i, 0)),
        ),
        compiler_params=pltpu.CompilerParams(
            dimension_semantics=("parallel",),   # megacore split on v7x
        ),
        cost_estimate=cost,
    )(t_arr, student_outputs, teacher_outputs)

    T = jnp.asarray(temperature, dtype=jnp.float32)
    return jnp.sum(kl_rows) / jnp.float32(B) * T * T


class FeatureDistributionLossJAX:
    """Mirrors the PyTorch module's __init__ (temperature schedule) + forward."""

    def __init__(self, nepochs, warmup_teacher_temp, teacher_temp,
                 warmup_teacher_temp_epochs):
        # nn.MSELoss is created in the torch module but unused in forward.
        self.teacher_temp_schedule = np.concatenate((
            np.linspace(warmup_teacher_temp, teacher_temp,
                        warmup_teacher_temp_epochs),
            np.ones(nepochs - warmup_teacher_temp_epochs) * teacher_temp,
        ))

    def __call__(self, student_outputs, teacher_outputs, epoch, label=None,
                 pred_label=None):
        T = float(self.teacher_temp_schedule[epoch])
        return feature_distribution_loss_pallas(student_outputs,
                                                teacher_outputs, T)


def _reference_loss(student, teacher, T):
    """Pure-JAX reference for sanity checking."""
    soft_targets = jax.nn.softmax(teacher / T, axis=-1)
    soft_prob = jax.nn.log_softmax(student / T, axis=-1)
    B = student.shape[0]
    return (jnp.sum(soft_targets * (jnp.log(soft_targets) - soft_prob))
            / B * T ** 2)


if __name__ == "__main__":
    key = jax.random.PRNGKey(0)
    k1, k2, k3, k4, k5, k6 = jax.random.split(key, 6)

    nepochs = 100
    loss_mod = FeatureDistributionLossJAX(
        nepochs=nepochs,
        warmup_teacher_temp=1.65,
        teacher_temp=0.22,
        warmup_teacher_temp_epochs=50,
    )
    epoch = 10
    T = float(loss_mod.teacher_temp_schedule[epoch])

    # Test 1: small single-tile case (matches the module's typical call shape).
    B, C = 8, 32
    student = jax.random.normal(k1, (B, C), dtype=jnp.float32)
    teacher = jax.random.normal(k2, (B, C), dtype=jnp.float32)

    loss = jax.block_until_ready(loss_mod(student, teacher, epoch, label=None))
    ref = jax.block_until_ready(_reference_loss(student, teacher, T))
    assert np.isfinite(float(loss))
    np.testing.assert_allclose(float(loss), float(ref), rtol=1e-4, atol=1e-5)

    # Test 2: multi-tile "parallel" grid with a partial last tile
    # (B=20, TILE_B=8 -> 3 grid steps, last one clamped on writeback).
    B2, C2 = 20, 128
    student2 = jax.random.normal(k3, (B2, C2), dtype=jnp.float32)
    teacher2 = jax.random.normal(k4, (B2, C2), dtype=jnp.float32)
    loss2 = jax.block_until_ready(
        feature_distribution_loss_pallas(student2, teacher2, T, tile_rows=8))
    ref2 = jax.block_until_ready(_reference_loss(student2, teacher2, T))
    assert np.isfinite(float(loss2))
    np.testing.assert_allclose(float(loss2), float(ref2), rtol=1e-4, atol=1e-5)

    # Test 3: bf16 logits (halved HBM traffic); kernel math stays in f32.
    B3, C3 = 16, 256
    student3 = jax.random.normal(k5, (B3, C3), dtype=jnp.float32)
    teacher3 = jax.random.normal(k6, (B3, C3), dtype=jnp.float32)
    s3_bf16 = student3.astype(jnp.bfloat16)
    t3_bf16 = teacher3.astype(jnp.bfloat16)
    loss3 = jax.block_until_ready(
        feature_distribution_loss_pallas(s3_bf16, t3_bf16, T))
    ref3 = jax.block_until_ready(
        _reference_loss(s3_bf16.astype(jnp.float32),
                        t3_bf16.astype(jnp.float32), T))
    assert np.isfinite(float(loss3))
    np.testing.assert_allclose(float(loss3), float(ref3), rtol=1e-4, atol=1e-5)

    print("KERNEL_OK")
</pallas_src>

<mosaic_0001>
module attributes {stable_mosaic.version = 11 : i64} {
  func.func @_kl_distill_kernel(%arg0: i32, %arg1: memref<1xf32, #tpu.memory_space<smem>>, %arg2: memref<8x32xf32, #tpu.memory_space<vmem>>, %arg3: memref<8x32xf32, #tpu.memory_space<vmem>>, %arg4: memref<8x1xf32, #tpu.memory_space<vmem>>) attributes {dimension_semantics = [#tpu.dimension_semantics<parallel>], iteration_bounds = array<i64: 1>, scalar_prefetch = 1 : i64, scratch_operands = 0 : i64, tpu.core_type = #tpu.core_type<tc>, window_params = [{transform_indices = @transform_0, window_bounds = array<i64: 8, 32>}, {transform_indices = @transform_1, window_bounds = array<i64: 8, 32>}, {transform_indices = @transform_2, window_bounds = array<i64: 8, 1>}]} {
    %c0 = arith.constant 0 : index
    %0 = memref.load %arg1[%c0] : memref<1xf32, #tpu.memory_space<smem>>
    %cst = arith.constant 1.000000e+00 : f32
    %1 = arith.divf %cst, %0 : f32
    %c0_0 = arith.constant 0 : index
    %c0_1 = arith.constant 0 : index
    %2 = vector.load %arg2[%c0_0, %c0_1] : memref<8x32xf32, #tpu.memory_space<vmem>>, vector<8x32xf32>
    %3 = vector.broadcast %1 : f32 to vector<8x32xf32>
    %4 = arith.mulf %2, %3 : vector<8x32xf32>
    %c0_2 = arith.constant 0 : index
    %c0_3 = arith.constant 0 : index
    %5 = vector.load %arg3[%c0_2, %c0_3] : memref<8x32xf32, #tpu.memory_space<vmem>>, vector<8x32xf32>
    %6 = vector.broadcast %1 : f32 to vector<8x32xf32>
    %7 = arith.mulf %5, %6 : vector<8x32xf32>
    %cst_4 = arith.constant dense<0xFF800000> : vector<8xf32>
    %8 = vector.multi_reduction <maximumf>, %7, %cst_4 [1] : vector<8x32xf32> to vector<8xf32>
    %9 = vector.shape_cast %8 : vector<8xf32> to vector<8x1xf32>
    %10 = vector.broadcast %9 : vector<8x1xf32> to vector<8x32xf32>
    %11 = arith.subf %7, %10 : vector<8x32xf32>
    %12 = math.exp %11 : vector<8x32xf32>
    %cst_5 = arith.constant dense<0.000000e+00> : vector<8xf32>
    %13 = vector.multi_reduction <add>, %12, %cst_5 [1] : vector<8x32xf32> to vector<8xf32>
    %14 = vector.shape_cast %13 : vector<8xf32> to vector<8x1xf32>
    %cst_6 = arith.constant dense<0xFF800000> : vector<8xf32>
    %15 = vector.multi_reduction <maximumf>, %4, %cst_6 [1] : vector<8x32xf32> to vector<8xf32>
    %16 = vector.shape_cast %15 : vector<8xf32> to vector<8x1xf32>
    %17 = vector.broadcast %16 : vector<8x1xf32> to vector<8x32xf32>
    %18 = arith.subf %4, %17 : vector<8x32xf32>
    %19 = math.exp %18 : vector<8x32xf32>
    %cst_7 = arith.constant dense<0.000000e+00> : vector<8xf32>
    %20 = vector.multi_reduction <add>, %19, %cst_7 [1] : vector<8x32xf32> to vector<8xf32>
    %21 = vector.shape_cast %20 : vector<8xf32> to vector<8x1xf32>
    %22 = math.log %21 : vector<8x1xf32>
    %23 = arith.subf %11, %18 : vector<8x32xf32>
    %24 = arith.mulf %12, %23 : vector<8x32xf32>
    %cst_8 = arith.constant dense<0.000000e+00> : vector<8xf32>
    %25 = vector.multi_reduction <add>, %24, %cst_8 [1] : vector<8x32xf32> to vector<8xf32>
    %26 = vector.shape_cast %25 : vector<8xf32> to vector<8x1xf32>
    %27 = arith.divf %26, %14 : vector<8x1xf32>
    %28 = math.log %14 : vector<8x1xf32>
    %29 = arith.subf %22, %28 : vector<8x1xf32>
    %30 = arith.addf %27, %29 : vector<8x1xf32>
    %c0_9 = arith.constant 0 : index
    %c0_10 = arith.constant 0 : index
    %31 = vector.load %arg4[%c0_9, %c0_10] : memref<8x1xf32, #tpu.memory_space<vmem>>, vector<8x1xf32>
    tpu.vector_store %arg4[%c0_9, %c0_10], %30 {strides = array<i32>} : memref<8x1xf32, #tpu.memory_space<vmem>>, vector<8x1xf32>,
    return
  }
  func.func @transform_0(%arg0: i32, %arg1: memref<1xf32, #tpu.memory_space<smem>>) -> (i32, i32) {
    %c0_i32 = arith.constant 0 : i32
    %c0_i32_0 = arith.constant 0 : i32
    return %arg0, %c0_i32 : i32, i32
  }
  func.func @transform_1(%arg0: i32, %arg1: memref<1xf32, #tpu.memory_space<smem>>) -> (i32, i32) {
    %c0_i32 = arith.constant 0 : i32
    %c0_i32_0 = arith.constant 0 : i32
    return %arg0, %c0_i32 : i32, i32
  }
  func.func @transform_2(%arg0: i32, %arg1: memref<1xf32, #tpu.memory_space<smem>>) -> (i32, i32) {
    %c0_i32 = arith.constant 0 : i32
    %c0_i32_0 = arith.constant 0 : i32
    return %arg0, %c0_i32 : i32, i32
  }
}

</mosaic_0001>

<llo_original>
// kernel: tpu_custom_call.1
$region0: #{tpu_custom_call.1}
  #allocation0 [shape = 'u32[]', space=smem, size = 0x4, offset = 0x4, fixed_abs, tag = 'smem constant byte address 0x4 - core index']
  #allocation1 [shape = 'u32[144,128]{1,0:T(1,128)}', space=vmem, size = 0x12000, scoped, tag = 'internal scratch']
  #allocation2 [shape = 's32[1]{0}', space=sflag, size = 0x4, scoped, tag = 'scoped memory for tpu_custom_call.1']
  #allocation3 [shape = 'f32[1]{0:T(128)S(6)}', space=smem, size = 0x200, scoped, tag = 'prefetched SMEM operand 0']
  %s0 = inlined_call_operand.<no memory space> [shape: f32[1], index: 0, kind: input, shape index: {}]
  %s1 = inlined_call_operand.hbm [shape: f32[8,32], index: 1, kind: input, shape index: {}]
  %s2 = inlined_call_operand.hbm [shape: f32[8,32], index: 2, kind: input, shape index: {}]
  %s3 = inlined_call_operand.vmem [shape: f32[8,1], index: 3, kind: output, shape index: {}]
  %s4 = sld [smem:[#allocation0]]
  $region26: #{tpu_custom_call.1} parent=0
    _
  %s6 = ssub.s32 1, %s4
  %s7 = scalar_select 0, %s6, %s4
  %8 = sst [smem:[#allocation3]] %s0
  $region1: #{tpu_custom_call.1} parent=0
    #allocation4 [shape = 'u8[4096]{0}', space=vmem, size = 0x1000, scoped, tag = 'input window, operand 1, single buffered']
    #allocation5 [shape = 's32[1]{0}', space=sflag, size = 0x4, scoped, tag = 'scoped memory for tpu_custom_call.1']
    #allocation6 [shape = 'u8[4096]{0}', space=vmem, size = 0x1000, scoped, tag = 'input window, operand 2, single buffered']
    #allocation7 [shape = 's32[1]{0}', space=sflag, size = 0x4, scoped, tag = 'scoped memory for tpu_custom_call.1']
    %9 = vsyncpa [#allocation5], 0
    %10 = vsyncpa [#allocation7], 0
    // Predicated region
    $region2: #{tpu_custom_call.1} parent=1 // pred_check
      _
    $region3: #{tpu_custom_call.1} parent=1 // pred_check_branch
      %12 = sbr.rel (0) target = $region5
    $region4: #{tpu_custom_call.1} parent=1 // pred_region
      %s14 = ssub.s32 128, 128
      %15 = vsyncadd [#allocation5], %s14
      %s17 = sshll.u32 [#allocation4], 4
      %s18 = int_to_ptr.vmem [resolvable:$true] %s17
      %20 = dma.hbm_to_vmem [thread:$0]  %s1, 128, %s18, [#allocation5]
    $region5: #{tpu_custom_call.1} parent=1 // pred_fallthru
      _
    // Predicated region
    $region6: #{tpu_custom_call.1} parent=1 // pred_check
      _
    $region7: #{tpu_custom_call.1} parent=1 // pred_check_branch
      %22 = sbr.rel (0) target = $region9
    $region8: #{tpu_custom_call.1} parent=1 // pred_region
      %s24 = ssub.s32 128, 128
      %25 = vsyncadd [#allocation7], %s24
      %s27 = sshll.u32 [#allocation6], 4
      %s28 = int_to_ptr.vmem [resolvable:$true] %s27
      %30 = dma.hbm_to_vmem [thread:$0]  %s2, 128, %s28, [#allocation7]
    $region9: #{tpu_custom_call.1} parent=1 // pred_fallthru
      _
    // Predicated region
    $region10: #{tpu_custom_call.1} parent=1 // pred_check
      _
    $region11: #{tpu_custom_call.1} parent=1 // pred_check_branch
      %32 = sbr.rel (0) target = $region13
    $region12: #{tpu_custom_call.1} parent=1 // pred_region
      %33 = dma.done [#allocation5], 128
    $region13: #{tpu_custom_call.1} parent=1 // pred_fallthru
      _
    // Predicated region
    $region14: #{tpu_custom_call.1} parent=1 // pred_check
      _
    $region15: #{tpu_custom_call.1} parent=1 // pred_check_branch
      %35 = sbr.rel (0) target = $region17
    $region16: #{tpu_custom_call.1} parent=1 // pred_region
      %36 = dma.done [#allocation7], 128
    $region17: #{tpu_custom_call.1} parent=1 // pred_fallthru
      _
    %s37 = sld [smem:[#allocation3]]
    %v38 = vstv %s37
    %v39 = vrcp.pop %v38
    %s40 = vtos %v39
    %v41 = vld [vmem:[#allocation4] sm:$0xff]
    %v42 = vstv %s40
    %v43 = vmul.f32 %v41, %v42
    %v44 = vld [vmem:[#allocation6] sm:$0xff]
    %v45 = vmul.f32 %v44, %v42
    %vm46 = vcmask 261120
    %v47 = vsel %vm46, %v45, -inf
    %48 = vmax.xlane.f32.xlu0 %v47
    %v49 = vpop.xlane.xlu0 %48
    %v50 = vsub.f32 %v45, %v49
    %v51 = vmul.f32 %v50, 1.442695
    %v52 = vpow.pop %v51
    %v53 = vsel %vm46, %v52, 0.0
    %54 = vadd.xlane.f32.xlu0 %v53
    %v55 = vpop.xlane.xlu0 %54
    %v56 = vsel %vm46, %v43, -inf
    %57 = vmax.xlane.f32.xlu0 %v56
    %v58 = vpop.xlane.xlu0 %57
    %v59 = vsub.f32 %v43, %v58
    %v60 = vmul.f32 %v59, 1.442695
    %v61 = vpow.pop %v60
    %v62 = vsel %vm46, %v61, 0.0
    %63 = vadd.xlane.f32.xlu0 %v62
    %v64 = vpop.xlane.xlu0 %63
    %v65 = vlog2.pop %v64
    %v66 = vmul.f32 %v65, 0.6931472
    %v67 = vsub.f32 %v50, %v59
    %v68 = vmul.f32 %v52, %v67
    %v69 = vsel %vm46, %v68, 0.0
    %70 = vadd.xlane.f32.xlu0 %v69
    %v71 = vpop.xlane.xlu0 %70
    %v72 = vrcp.pop %v55
    %v73 = vmul.f32 %v71, %v72
    %v74 = vlog2.pop %v55
    %v75 = vmul.f32 %v74, 0.6931472
    %v76 = vsub.f32 %v66, %v75
    %v77 = vadd.f32 %v73, %v76
    %vm78 = vcmask 7168
    %79 = vst.msk [vmem:[%s3] sm:$0xff] %vm78, %v77
    // Predicated region
    $region18: #{tpu_custom_call.1} parent=1 // pred_check
      _
    $region19: #{tpu_custom_call.1} parent=1 // pred_check_branch
      %81 = sbr.rel (0) target = $region21
    $region20: #{tpu_custom_call.1} parent=1 // pred_region
      _
    $region21: #{tpu_custom_call.1} parent=1 // pred_fallthru
      _
    // Predicated region
    $region22: #{tpu_custom_call.1} parent=1 // pred_check
      _
    $region23: #{tpu_custom_call.1} parent=1 // pred_check_branch
      %83 = sbr.rel (0) target = $region25
    $region24: #{tpu_custom_call.1} parent=1 // pred_region
      _
    $region25: #{tpu_custom_call.1} parent=1 // pred_fallthru
      _
    %84 = vsyncpa [#allocation5], 1
    %85 = vsyncpa [#allocation7], 1

</llo_original>
